<compile_context>
chip_gen: v7x
topology: tpu7x:2x2x1
jax: 0.10.0
libtpu: 0.0.40
codegen_flags: <defaults>
</compile_context>

<pallas_src>
import jax
import jax.numpy as jnp
from jax.experimental import pallas as pl
from jax.experimental.pallas import tpu as pltpu


def _round_up(n, m):
    return ((n + m - 1) // m) * m


def _mlp_kernel(x_ref, w1_ref, b1_ref, w2_ref, b2_ref, o_ref):
    # Fused: Linear -> ReLU -> Linear -> ReLU. Weights arrive pre-transposed
    # to (in, out) so this is the standard row-major contraction (no vxpose).
    x = x_ref[...]                                          # (B_TILE, F) f32
    h = jnp.dot(x, w1_ref[...], preferred_element_type=jnp.float32)
    h = jnp.maximum(h + b1_ref[...], 0.0)                   # bias + ReLU in f32
    y = jnp.dot(h, w2_ref[...], preferred_element_type=jnp.float32)
    y = jnp.maximum(y + b2_ref[...], 0.0)                   # final ReLU (module spec)
    o_ref[...] = y.astype(o_ref.dtype)


def prepare_params(w1, b1, w2, b2):
    """One-time parameter prep (call at init, NOT per forward).

    w1, w2: torch layout (out_features, in_features); b1, b2: (out_features,).
    Returns (w1t, b1r, w2t, b2r) with weights transposed to (in, out) and
    biases reshaped to (1, F) for lane broadcast inside the kernel.
    """
    return (jnp.asarray(w1).T, jnp.asarray(b1).reshape(1, -1),
            jnp.asarray(w2).T, jnp.asarray(b2).reshape(1, -1))


def seq_forward(x, params, *, max_batch_tile=2048, force_pallas=False):
    """x: (B, F) with F = 10; params from prepare_params()."""
    w1t, b1r, w2t, b2r = params
    B, F = x.shape

    # Small-problem fast path: a few hundred FLOPs — pallas launch overhead
    # would dominate, so use the fused XLA expression directly.
    if not force_pallas and B <= 64:
        h = jnp.maximum(x @ w1t + b1r, 0.0)
        return jnp.maximum(h @ w2t + b2r, 0.0).astype(x.dtype)

    # ---- adaptive batch tiling -------------------------------------------
    b_aligned = _round_up(B, 8)
    n_tiles = max(1, pl.cdiv(b_aligned, max_batch_tile))
    if n_tiles == 1 and b_aligned >= 64:
        n_tiles = 2                      # give both v7x TensorCores work
    b_tile = _round_up(pl.cdiv(b_aligned, n_tiles), 8)
    n_grid = pl.cdiv(b_aligned, b_tile)
    b_pad = n_grid * b_tile              # pad waste bounded (< 8 rows per tile)

    if b_pad != B:
        xp = jnp.zeros((b_pad, F), x.dtype).at[:B].set(x)
    else:
        xp = x

    # Weights/biases: constant index_map -> DMA'd once, resident in VMEM.
    # (Default double-buffering of these ~0.4 KiB operands is negligible.)
    out = pl.pallas_call(
        _mlp_kernel,
        out_shape=jax.ShapeDtypeStruct((b_pad, F), x.dtype),
        grid=(n_grid,),
        in_specs=[
            pl.BlockSpec((b_tile, F), lambda i: (i, 0)),   # x: tiled over batch
            pl.BlockSpec((F, F), lambda i: (0, 0)),        # w1t: resident
            pl.BlockSpec((1, F), lambda i: (0, 0)),        # b1: resident
            pl.BlockSpec((F, F), lambda i: (0, 0)),        # w2t: resident
            pl.BlockSpec((1, F), lambda i: (0, 0)),        # b2: resident
        ],
        out_specs=pl.BlockSpec((b_tile, F), lambda i: (i, 0)),
        compiler_params=pltpu.CompilerParams(
            dimension_semantics=("parallel",),
        ),
    )(xp, w1t, b1r, w2t, b2r)

    return out[:B] if b_pad != B else out


if __name__ == "__main__":
    key = jax.random.PRNGKey(0)
    k_x, k_x2, k_w1, k_b1, k_w2, k_b2 = jax.random.split(key, 6)

    B, F = 8, 10  # batch=8, features=10 (Linear(10, 10))
    x = jax.random.normal(k_x, (B, F), dtype=jnp.float32)

    # Deterministic params mimicking torch.nn.Linear init uniform(-1/sqrt(in), 1/sqrt(in)).
    bound = 1.0 / (F ** 0.5)
    w1 = jax.random.uniform(k_w1, (F, F), jnp.float32, -bound, bound)
    b1 = jax.random.uniform(k_b1, (F,), jnp.float32, -bound, bound)
    w2 = jax.random.uniform(k_w2, (F, F), jnp.float32, -bound, bound)
    b2 = jax.random.uniform(k_b2, (F,), jnp.float32, -bound, bound)

    params = prepare_params(w1, b1, w2, b2)   # hoisted one-time prep

    def reference(xv):
        h = jnp.maximum(xv @ w1.T + b1, 0.0)
        return jnp.maximum(h @ w2.T + b2, 0.0)

    # 1) Pallas kernel on the spec-sized input (force past the fast path).
    out_pallas = jax.block_until_ready(seq_forward(x, params, force_pallas=True))
    assert out_pallas.shape == (B, F)
    assert jnp.allclose(out_pallas, reference(x), atol=1e-5), "pallas mismatch vs reference"

    # 2) Default path for the tiny size (fused-XLA fast path).
    out_fast = jax.block_until_ready(seq_forward(x, params))
    assert jnp.allclose(out_fast, reference(x), atol=1e-5), "fast-path mismatch vs reference"

    # 3) Mid-size batch: exercises the multi-tile batch grid (2 "parallel" steps).
    B2 = 192
    x2 = jax.random.normal(k_x2, (B2, F), dtype=jnp.float32)
    out2 = jax.block_until_ready(seq_forward(x2, params))
    assert out2.shape == (B2, F)
    assert jnp.allclose(out2, reference(x2), atol=1e-5), "multi-tile mismatch vs reference"

    print("KERNEL_OK")
</pallas_src>

<mosaic_0001>
module attributes {stable_mosaic.version = 11 : i64} {
  func.func @_mlp_kernel(%arg0: i32, %arg1: memref<8x10xf32, #tpu.memory_space<vmem>>, %arg2: memref<10x10xf32, #tpu.memory_space<vmem>>, %arg3: memref<1x10xf32, #tpu.memory_space<vmem>>, %arg4: memref<10x10xf32, #tpu.memory_space<vmem>>, %arg5: memref<1x10xf32, #tpu.memory_space<vmem>>, %arg6: memref<8x10xf32, #tpu.memory_space<vmem>>) attributes {dimension_semantics = [#tpu.dimension_semantics<parallel>], iteration_bounds = array<i64: 1>, scalar_prefetch = 0 : i64, scratch_operands = 0 : i64, tpu.core_type = #tpu.core_type<tc>, window_params = [{transform_indices = @transform_0, window_bounds = array<i64: 8, 10>}, {pipeline_mode = #tpu.pipeline_mode<synchronous>, transform_indices = @transform_1, window_bounds = array<i64: 10, 10>}, {pipeline_mode = #tpu.pipeline_mode<synchronous>, transform_indices = @transform_2, window_bounds = array<i64: 1, 10>}, {pipeline_mode = #tpu.pipeline_mode<synchronous>, transform_indices = @transform_3, window_bounds = array<i64: 10, 10>}, {pipeline_mode = #tpu.pipeline_mode<synchronous>, transform_indices = @transform_4, window_bounds = array<i64: 1, 10>}, {transform_indices = @transform_5, window_bounds = array<i64: 8, 10>}]} {
    %c0 = arith.constant 0 : index
    %c0_0 = arith.constant 0 : index
    %0 = vector.load %arg1[%c0, %c0_0] : memref<8x10xf32, #tpu.memory_space<vmem>>, vector<8x10xf32>
    %c0_1 = arith.constant 0 : index
    %c0_2 = arith.constant 0 : index
    %1 = vector.load %arg2[%c0_1, %c0_2] : memref<10x10xf32, #tpu.memory_space<vmem>>, vector<10x10xf32>
    %cst = arith.constant dense<0.000000e+00> : vector<8x10xf32>
    %2 = tpu.matmul %0, %1, %cst {dimension_numbers = #tpu.dot_dimension_numbers<[1], [0], [0], [1], [0, 0, 1, 1], [], []>} : vector<8x10xf32>, vector<10x10xf32>, vector<8x10xf32> -> vector<8x10xf32>
    %c0_3 = arith.constant 0 : index
    %c0_4 = arith.constant 0 : index
    %3 = vector.load %arg3[%c0_3, %c0_4] : memref<1x10xf32, #tpu.memory_space<vmem>>, vector<1x10xf32>
    %4 = vector.broadcast %3 : vector<1x10xf32> to vector<8x10xf32>
    %5 = arith.addf %2, %4 : vector<8x10xf32>
    %cst_5 = arith.constant 0.000000e+00 : f32
    %6 = vector.broadcast %cst_5 : f32 to vector<8x10xf32>
    %7 = arith.maximumf %5, %6 : vector<8x10xf32>
    %c0_6 = arith.constant 0 : index
    %c0_7 = arith.constant 0 : index
    %8 = vector.load %arg4[%c0_6, %c0_7] : memref<10x10xf32, #tpu.memory_space<vmem>>, vector<10x10xf32>
    %cst_8 = arith.constant dense<0.000000e+00> : vector<8x10xf32>
    %9 = tpu.matmul %7, %8, %cst_8 {dimension_numbers = #tpu.dot_dimension_numbers<[1], [0], [0], [1], [0, 0, 1, 1], [], []>} : vector<8x10xf32>, vector<10x10xf32>, vector<8x10xf32> -> vector<8x10xf32>
    %c0_9 = arith.constant 0 : index
    %c0_10 = arith.constant 0 : index
    %10 = vector.load %arg5[%c0_9, %c0_10] : memref<1x10xf32, #tpu.memory_space<vmem>>, vector<1x10xf32>
    %11 = vector.broadcast %10 : vector<1x10xf32> to vector<8x10xf32>
    %12 = arith.addf %9, %11 : vector<8x10xf32>
    %cst_11 = arith.constant 0.000000e+00 : f32
    %13 = vector.broadcast %cst_11 : f32 to vector<8x10xf32>
    %14 = arith.maximumf %12, %13 : vector<8x10xf32>
    %c0_12 = arith.constant 0 : index
    %c0_13 = arith.constant 0 : index
    %15 = vector.load %arg6[%c0_12, %c0_13] : memref<8x10xf32, #tpu.memory_space<vmem>>, vector<8x10xf32>
    tpu.vector_store %arg6[%c0_12, %c0_13], %14 {strides = array<i32>} : memref<8x10xf32, #tpu.memory_space<vmem>>, vector<8x10xf32>,
    return
  }
  func.func @transform_0(%arg0: i32) -> (i32, i32) {
    %c0_i32 = arith.constant 0 : i32
    %c0_i32_0 = arith.constant 0 : i32
    return %arg0, %c0_i32 : i32, i32
  }
  func.func @transform_1(%arg0: i32) -> (i32, i32) {
    %c0_i32 = arith.constant 0 : i32
    %c0_i32_0 = arith.constant 0 : i32
    %c0_i32_1 = arith.constant 0 : i32
    return %c0_i32, %c0_i32_0 : i32, i32
  }
  func.func @transform_2(%arg0: i32) -> (i32, i32) {
    %c0_i32 = arith.constant 0 : i32
    %c0_i32_0 = arith.constant 0 : i32
    %c0_i32_1 = arith.constant 0 : i32
    return %c0_i32, %c0_i32_0 : i32, i32
  }
  func.func @transform_3(%arg0: i32) -> (i32, i32) {
    %c0_i32 = arith.constant 0 : i32
    %c0_i32_0 = arith.constant 0 : i32
    %c0_i32_1 = arith.constant 0 : i32
    return %c0_i32, %c0_i32_0 : i32, i32
  }
  func.func @transform_4(%arg0: i32) -> (i32, i32) {
    %c0_i32 = arith.constant 0 : i32
    %c0_i32_0 = arith.constant 0 : i32
    %c0_i32_1 = arith.constant 0 : i32
    return %c0_i32, %c0_i32_0 : i32, i32
  }
  func.func @transform_5(%arg0: i32) -> (i32, i32) {
    %c0_i32 = arith.constant 0 : i32
    %c0_i32_0 = arith.constant 0 : i32
    return %arg0, %c0_i32 : i32, i32
  }
}

</mosaic_0001>

<llo_original>
// kernel: tpu_custom_call.1
$region0: #{tpu_custom_call.1}
  #allocation0 [shape = 'u32[]', space=smem, size = 0x4, offset = 0x4, fixed_abs, tag = 'smem constant byte address 0x4 - core index']
  #allocation1 [shape = 'u32[144,128]{1,0:T(1,128)}', space=vmem, size = 0x12000, scoped, tag = 'internal scratch']
  %s0 = inlined_call_operand.hbm [shape: f32[8,10], index: 0, kind: input, shape index: {}]
  %s1 = inlined_call_operand.hbm [shape: f32[10,10], index: 1, kind: input, shape index: {}]
  %s2 = inlined_call_operand.vmem [shape: f32[1,10], index: 2, kind: input, shape index: {}]
  %s3 = inlined_call_operand.hbm [shape: f32[10,10], index: 3, kind: input, shape index: {}]
  %s4 = inlined_call_operand.vmem [shape: f32[1,10], index: 4, kind: input, shape index: {}]
  %s5 = inlined_call_operand.hbm [shape: f32[8,10], index: 5, kind: output, shape index: {}]
  %s6 = sld [smem:[#allocation0]]
  $region42: #{tpu_custom_call.1} parent=0
    _
  %s8 = ssub.s32 1, %s6
  %s9 = scalar_select 0, %s8, %s6
  $region1: #{tpu_custom_call.1} parent=0
    #allocation2 [shape = 'u8[4096]{0}', space=vmem, size = 0x1000, scoped, tag = 'input window, operand 0, single buffered']
    #allocation3 [shape = 's32[1]{0}', space=sflag, size = 0x4, scoped, tag = 'scoped memory for tpu_custom_call.1']
    #allocation4 [shape = 's32[1]{0}', space=sflag, size = 0x4, scoped, tag = 'scoped memory for tpu_custom_call.1']
    #allocation5 [shape = 'u8[8192]{0}', space=vmem, size = 0x2000, scoped, tag = 'input window, operand 1, single buffered']
    #allocation6 [shape = 's32[1]{0}', space=sflag, size = 0x4, scoped, tag = 'scoped memory for tpu_custom_call.1']
    #allocation7 [shape = 'u8[8192]{0}', space=vmem, size = 0x2000, scoped, tag = 'input window, operand 3, single buffered']
    #allocation8 [shape = 'u8[4096]{0}', space=vmem, size = 0x1000, scoped, tag = 'output window, operand 0, single buffered']
    %10 = vsyncpa [#allocation3], 0
    %11 = vsyncpa [#allocation6], 0
    %12 = vsyncpa [#allocation4], 0
    // Predicated region
    $region2: #{tpu_custom_call.1} parent=1 // pred_check
      _
    $region3: #{tpu_custom_call.1} parent=1 // pred_check_branch
      %14 = sbr.rel (0) target = $region5
    $region4: #{tpu_custom_call.1} parent=1 // pred_region
      %s16 = ssub.s32 128, 128
      %17 = vsyncadd [#allocation3], %s16
      %s19 = sshll.u32 [#allocation2], 4
      %s20 = int_to_ptr.vmem [resolvable:$true] %s19
      %22 = dma.hbm_to_vmem [thread:$0]  %s0, 128, %s20, [#allocation3]
    $region5: #{tpu_custom_call.1} parent=1 // pred_fallthru
      _
    // Predicated region
    $region6: #{tpu_custom_call.1} parent=1 // pred_check
      _
    $region7: #{tpu_custom_call.1} parent=1 // pred_check_branch
      %24 = sbr.rel (0) target = $region9
    $region8: #{tpu_custom_call.1} parent=1 // pred_region
      %s26 = ssub.s32 256, 256
      %27 = vsyncadd [#allocation6], %s26
      %s28 = sshll.u32 [#allocation5], 4
      %s29 = int_to_ptr.vmem [resolvable:$true] %s28
      %34 = dma.hbm_to_vmem [thread:$0]  %s1, 256, %s29, [#allocation6], 128, 128, 8
    $region9: #{tpu_custom_call.1} parent=1 // pred_fallthru
      _
    // Predicated region
    $region10: #{tpu_custom_call.1} parent=1 // pred_check
      _
    $region11: #{tpu_custom_call.1} parent=1 // pred_check_branch
      %36 = sbr.rel (0) target = $region13
    $region12: #{tpu_custom_call.1} parent=1 // pred_region
      _
    $region13: #{tpu_custom_call.1} parent=1 // pred_fallthru
      _
    // Predicated region
    $region14: #{tpu_custom_call.1} parent=1 // pred_check
      _
    $region15: #{tpu_custom_call.1} parent=1 // pred_check_branch
      %38 = sbr.rel (0) target = $region17
    $region16: #{tpu_custom_call.1} parent=1 // pred_region
      %s40 = ssub.s32 256, 256
      %41 = vsyncadd [#allocation6], %s40
      %s42 = sshll.u32 [#allocation7], 4
      %s43 = int_to_ptr.vmem [resolvable:$true] %s42
      %48 = dma.hbm_to_vmem [thread:$0]  %s3, 256, %s43, [#allocation6], 128, 128, 8
    $region17: #{tpu_custom_call.1} parent=1 // pred_fallthru
      _
    // Predicated region
    $region18: #{tpu_custom_call.1} parent=1 // pred_check
      _
    $region19: #{tpu_custom_call.1} parent=1 // pred_check_branch
      %50 = sbr.rel (0) target = $region21
    $region20: #{tpu_custom_call.1} parent=1 // pred_region
      _
    $region21: #{tpu_custom_call.1} parent=1 // pred_fallthru
      _
    // Predicated region
    $region22: #{tpu_custom_call.1} parent=1 // pred_check
      _
    $region23: #{tpu_custom_call.1} parent=1 // pred_check_branch
      %52 = sbr.rel (0) target = $region25
    $region24: #{tpu_custom_call.1} parent=1 // pred_region
      %53 = dma.done [#allocation3], 128
    $region25: #{tpu_custom_call.1} parent=1 // pred_fallthru
      _
    // Predicated region
    $region26: #{tpu_custom_call.1} parent=1 // pred_check
      _
    $region27: #{tpu_custom_call.1} parent=1 // pred_check_branch
      %55 = sbr.rel (0) target = $region29
    $region28: #{tpu_custom_call.1} parent=1 // pred_region
      %56 = dma.done [#allocation6], 256
    $region29: #{tpu_custom_call.1} parent=1 // pred_fallthru
      _
    // Predicated region
    $region30: #{tpu_custom_call.1} parent=1 // pred_check
      _
    $region31: #{tpu_custom_call.1} parent=1 // pred_check_branch
      %58 = sbr.rel (0) target = $region33
    $region32: #{tpu_custom_call.1} parent=1 // pred_region
      %59 = dma.done [#allocation6], 256
    $region33: #{tpu_custom_call.1} parent=1 // pred_fallthru
      _
    %v60 = vld [vmem:[#allocation2] sm:$0xff]
    %v61 = vld [vmem:[#allocation5] sm:$0xff]
    %v62 = vld [vmem:[#allocation5 + $0x8] sm:$0x3]
    %v63 = vld [vmem:[%s2] sm:$0x1]
    %v65 = vlaneseq
    %v66 = vshrl.u32 %v65, 7
    %v67 = vsub.s32 0, %v66
    %v68 = vrot.slane %v63, %v67
    %vm70 = vcmask 80896
    %v72 = vsel %vm70, %v60, 0
    %vm74 = vcmask 1041408
    %v76 = vsel %vm74, %v62, 0
    %78 = vmatprep.subr.mxu0 0.0
    %79 = vmatpush1.msra.mxu0 %v61
    %80 = vmatprep.subr.mxu0 0.0
    %81 = vmatpush1.msra.mxu0 %v76
    %82 = vmatprep.subr.mxu0 0.0
    %83 = vmatpush1.msra.mxu0 0.0
    %84 = vmatprep.subr.mxu0 0.0
    %85 = vmatpush1.msra.mxu0 0.0
    %86 = vmatprep.subr.mxu0 0.0
    %87 = vmatpush1.msra.mxu0 0.0
    %88 = vmatprep.subr.mxu0 0.0
    %89 = vmatpush1.msra.mxu0 0.0
    %90 = vmatprep.subr.mxu0 0.0
    %91 = vmatpush1.msra.mxu0 0.0
    %92 = vmatprep.subr.mxu0 0.0
    %93 = vmatpush1.msra.mxu0 0.0
    %94 = vmatprep.subr.mxu0 0.0
    %95 = vmatpush1.msra.mxu0 0.0
    %96 = vmatprep.subr.mxu0 0.0
    %97 = vmatpush1.msra.mxu0 0.0
    %98 = vmatprep.subr.mxu0 0.0
    %99 = vmatpush1.msra.mxu0 0.0
    %100 = vmatprep.subr.mxu0 0.0
    %101 = vmatpush1.msra.mxu0 0.0
    %102 = vmatprep.subr.mxu0 0.0
    %103 = vmatpush1.msra.mxu0 0.0
    %104 = vmatprep.subr.mxu0 0.0
    %105 = vmatpush1.msra.mxu0 0.0
    %106 = vmatprep.subr.mxu0 0.0
    %107 = vmatpush1.msra.mxu0 0.0
    %108 = vmatprep.subr.mxu0 0.0
    %109 = vmatpush1.msra.mxu0 0.0
    %110 = vmatprep.subr.mxu0 0.0
    %111 = vmatpush1.msra.mxu0 0.0
    %112 = vmatprep.subr.mxu0 0.0
    %113 = vmatpush1.msra.mxu0 0.0
    %114 = vmatprep.subr.mxu0 0.0
    %115 = vmatpush1.msra.mxu0 0.0
    %116 = vmatprep.subr.mxu0 0.0
    %117 = vmatpush1.msra.mxu0 0.0
    %118 = vmatprep.subr.mxu0 0.0
    %119 = vmatpush1.msra.mxu0 0.0
    %120 = vmatprep.subr.mxu0 0.0
    %121 = vmatpush1.msra.mxu0 0.0
    %122 = vmatprep.subr.mxu0 0.0
    %123 = vmatpush1.msra.mxu0 0.0
    %124 = vmatprep.subr.mxu0 0.0
    %125 = vmatpush1.msra.mxu0 0.0
    %126 = vmatprep.subr.mxu0 0.0
    %127 = vmatpush1.msra.mxu0 0.0
    %128 = vmatprep.subr.mxu0 0.0
    %129 = vmatpush1.msra.mxu0 0.0
    %130 = vmatprep.subr.mxu0 0.0
    %131 = vmatpush1.msra.mxu0 0.0
    %132 = vmatprep.subr.mxu0 0.0
    %133 = vmatpush1.msra.mxu0 0.0
    %134 = vmatprep.subr.mxu0 0.0
    %135 = vmatpush1.msra.mxu0 0.0
    %136 = vmatprep.subr.mxu0 0.0
    %137 = vmatpush1.msra.mxu0 0.0
    %138 = vmatprep.subr.mxu0 0.0
    %139 = vmatpush1.msra.mxu0 0.0
    %140 = vmatprep.subr.mxu0 0.0
    %141 = vmatpush1.msra.mxu0 0.0
    %142 = vmatprep.mubr.f32.mxu0 0.0
    %143 = vmatmul.mubr.f32.gmra.mrb[0].mxu0 %v72
    %v144 = vpop.f32.mrb[0].mxu0
    %v145 = vadd.f32 %v68, %v144
    %v146 = vpop.f32.mrb[0].mxu0
    %147 = vdwg.mxu0
    %v148 = vmax.f32 %v145, 0.0
    %v149 = vld [vmem:[#allocation7] sm:$0xff]
    %v150 = vld [vmem:[#allocation7 + $0x8] sm:$0x3]
    %v151 = vld [vmem:[%s4] sm:$0x1]
    %v153 = vlaneseq
    %v154 = vshrl.u32 %v153, 7
    %v155 = vsub.s32 0, %v154
    %v156 = vrot.slane %v151, %v155
    %v159 = vsel %vm70, %v148, 0
    %v162 = vsel %vm74, %v150, 0
    %164 = vmatprep.subr.mxu0 0.0
    %165 = vmatpush1.msra.mxu0 %v149
    %166 = vmatprep.subr.mxu0 0.0
    %167 = vmatpush1.msra.mxu0 %v162
    %168 = vmatprep.subr.mxu0 0.0
    %169 = vmatpush1.msra.mxu0 0.0
    %170 = vmatprep.subr.mxu0 0.0
    %171 = vmatpush1.msra.mxu0 0.0
    %172 = vmatprep.subr.mxu0 0.0
    %173 = vmatpush1.msra.mxu0 0.0
    %174 = vmatprep.subr.mxu0 0.0
    %175 = vmatpush1.msra.mxu0 0.0
    %176 = vmatprep.subr.mxu0 0.0
    %177 = vmatpush1.msra.mxu0 0.0
    %178 = vmatprep.subr.mxu0 0.0
    %179 = vmatpush1.msra.mxu0 0.0
    %180 = vmatprep.subr.mxu0 0.0
    %181 = vmatpush1.msra.mxu0 0.0
    %182 = vmatprep.subr.mxu0 0.0
    %183 = vmatpush1.msra.mxu0 0.0
    %184 = vmatprep.subr.mxu0 0.0
    %185 = vmatpush1.msra.mxu0 0.0
    %186 = vmatprep.subr.mxu0 0.0
    %187 = vmatpush1.msra.mxu0 0.0
    %188 = vmatprep.subr.mxu0 0.0
    %189 = vmatpush1.msra.mxu0 0.0
    %190 = vmatprep.subr.mxu0 0.0
    %191 = vmatpush1.msra.mxu0 0.0
    %192 = vmatprep.subr.mxu0 0.0
    %193 = vmatpush1.msra.mxu0 0.0
    %194 = vmatprep.subr.mxu0 0.0
    %195 = vmatpush1.msra.mxu0 0.0
    %196 = vmatprep.subr.mxu0 0.0
    %197 = vmatpush1.msra.mxu0 0.0
    %198 = vmatprep.subr.mxu0 0.0
    %199 = vmatpush1.msra.mxu0 0.0
    %200 = vmatprep.subr.mxu0 0.0
    %201 = vmatpush1.msra.mxu0 0.0
    %202 = vmatprep.subr.mxu0 0.0
    %203 = vmatpush1.msra.mxu0 0.0
    %204 = vmatprep.subr.mxu0 0.0
    %205 = vmatpush1.msra.mxu0 0.0
    %206 = vmatprep.subr.mxu0 0.0
    %207 = vmatpush1.msra.mxu0 0.0
    %208 = vmatprep.subr.mxu0 0.0
    %209 = vmatpush1.msra.mxu0 0.0
    %210 = vmatprep.subr.mxu0 0.0
    %211 = vmatpush1.msra.mxu0 0.0
    %212 = vmatprep.subr.mxu0 0.0
    %213 = vmatpush1.msra.mxu0 0.0
    %214 = vmatprep.subr.mxu0 0.0
    %215 = vmatpush1.msra.mxu0 0.0
    %216 = vmatprep.subr.mxu0 0.0
    %217 = vmatpush1.msra.mxu0 0.0
    %218 = vmatprep.subr.mxu0 0.0
    %219 = vmatpush1.msra.mxu0 0.0
    %220 = vmatprep.subr.mxu0 0.0
    %221 = vmatpush1.msra.mxu0 0.0
    %222 = vmatprep.subr.mxu0 0.0
    %223 = vmatpush1.msra.mxu0 0.0
    %224 = vmatprep.subr.mxu0 0.0
    %225 = vmatpush1.msra.mxu0 0.0
    %226 = vmatprep.subr.mxu0 0.0
    %227 = vmatpush1.msra.mxu0 0.0
    %228 = vmatprep.mubr.f32.mxu0 0.0
    %229 = vmatmul.mubr.f32.gmra.mrb[0].mxu0 %v159
    %v230 = vpop.f32.mrb[0].mxu0
    %v231 = vadd.f32 %v156, %v230
    %v232 = vpop.f32.mrb[0].mxu0
    %233 = vdwg.mxu0
    %v234 = vmax.f32 %v231, 0.0
    %235 = vst.msk [vmem:[#allocation8] sm:$0xff] %vm70, %v234
    // Predicated region
    $region34: #{tpu_custom_call.1} parent=1 // pred_check
      _
    $region35: #{tpu_custom_call.1} parent=1 // pred_check_branch
      %237 = sbr.rel (0) target = $region37
    $region36: #{tpu_custom_call.1} parent=1 // pred_region
      %s239 = ssub.s32 128, 128
      %240 = vsyncadd [#allocation4], %s239
      %s242 = sshll.u32 [#allocation8], 4
      %s243 = int_to_ptr.vmem [resolvable:$true] %s242
      %245 = dma.vmem_to_hbm [thread:$0]  %s243, 128, %s5, [#allocation4]
    $region37: #{tpu_custom_call.1} parent=1 // pred_fallthru
      _
    // Predicated region
    $region38: #{tpu_custom_call.1} parent=1 // pred_check
      _
    $region39: #{tpu_custom_call.1} parent=1 // pred_check_branch
      %247 = sbr.rel (0) target = $region41
    $region40: #{tpu_custom_call.1} parent=1 // pred_region
      %248 = dma.done [#allocation4], 128
    $region41: #{tpu_custom_call.1} parent=1 // pred_fallthru
      _
    %249 = vsyncpa [#allocation3], 1
    %250 = vsyncpa [#allocation6], 1
    %251 = vsyncpa [#allocation4], 1

</llo_original>
